<compile_context>
chip_gen: v7x
topology: tpu7x:2x2x1
jax: 0.10.0
libtpu: 0.0.40
codegen_flags: <defaults>
</compile_context>

<pallas_src>
import math

import jax
import jax.numpy as jnp
from jax.experimental import pallas as pl
from jax.experimental.pallas import tpu as pltpu


# --------------------------------------------------------------------------
# Pallas kernels
# --------------------------------------------------------------------------

def node_proj_kernel(xemb_ref, s_ref, w_emb_ref, w_s_ref, b_ref, o_ref):
    """proj_node: concat([embed(seq), node_s]) @ W + b (weights pre-split)."""
    o_ref[...] = (
        jnp.dot(xemb_ref[...], w_emb_ref[...], preferred_element_type=jnp.float32)
        + jnp.dot(s_ref[...], w_s_ref[...], preferred_element_type=jnp.float32)
        + b_ref[...])


def preproj_kernel(x_ref, w_ref, b_ref, q_ref, k_ref, v_ref, skip_ref, qe_ref):
    """Per-layer node-domain projections as ONE fused MXU matmul:
    y = x @ [Wq | Wk | Wv | Wskip | Wq@Wc^T] + [biases]; outputs sliced."""
    x = x_ref[...].astype(jnp.bfloat16)
    y = jnp.dot(x, w_ref[...], preferred_element_type=jnp.float32) + b_ref[...]
    dout = q_ref.shape[-1]
    q_ref[...] = y[:, 0 * dout:1 * dout].astype(jnp.bfloat16)
    k_ref[...] = y[:, 1 * dout:2 * dout].astype(jnp.bfloat16)
    v_ref[...] = y[:, 2 * dout:3 * dout].astype(jnp.bfloat16)
    skip_ref[...] = y[:, 3 * dout:4 * dout]
    qe_ref[...] = y[:, 4 * dout:]          # qe_i = q_i @ Wc^T  (raw-edge space)


def tconv_flash_kernel(q_ref, k_ref, v_ref, qe_ref, skip_ref, e_ref, mask_ref,
                       wc_ref, bc_ref, o_ref, m_sc, l_sc, accv_sc, acce_sc):
    """torch_geometric TransformerConv (heads=1, edge_dim, root_weight=True)
    + fused LeakyReLU(0.01), tiled flash-attention style over (dst, src) tiles.
    proj_edge/lin_edge are algebraically folded into (Wc, bc)."""
    j = pl.program_id(1)

    @pl.when(j == 0)
    def _():
        m_sc[...] = jnp.full_like(m_sc, -jnp.inf)
        l_sc[...] = jnp.zeros_like(l_sc)
        accv_sc[...] = jnp.zeros_like(accv_sc)
        acce_sc[...] = jnp.zeros_like(acce_sc)

    q = q_ref[...]          # (TM, D) bf16
    k = k_ref[...]          # (TK, D) bf16
    qe = qe_ref[...]        # (TM, Ce) f32   (Ce = raw edge dim, 39)
    e = e_ref[...]          # (TM, TK, Ce) bf16  (raw edge features, dense)
    mask = mask_ref[...]    # (TM, TK) f32
    d_out = q.shape[-1]

    # MXU: q . k^T
    s_node = jax.lax.dot_general(q, k, (((1,), (1,)), ((), ())),
                                 preferred_element_type=jnp.float32)   # (TM, TK)
    # Pair-domain edge score in the 39-dim raw-edge space (VPU broadcast-
    # reduce).  The per-dst-row constant q_i.bc is softmax-invariant -> dropped.
    s_edge = jnp.sum(qe[:, None, :] * e, axis=-1)                      # (TM, TK)

    scores = (s_node + s_edge) * jnp.float32(1.0 / math.sqrt(d_out))
    scores = jnp.where(mask > 0.0, scores, jnp.float32(-1e30))         # f32 math

    m_prev = m_sc[...]
    m_new = jnp.maximum(m_prev, jnp.max(scores, axis=-1, keepdims=True))
    a = jnp.exp(m_prev - m_new)                                        # (TM, 1)
    p = jnp.exp(scores - m_new) * mask                                 # (TM, TK)

    l_sc[...] = a * l_sc[...] + jnp.sum(p, axis=-1, keepdims=True)
    accv_sc[...] = a * accv_sc[...] + jnp.dot(
        p.astype(jnp.bfloat16), v_ref[...], preferred_element_type=jnp.float32)
    acce_sc[...] = a * acce_sc[...] + jnp.sum(p[:, :, None] * e, axis=1)
    m_sc[...] = m_new

    @pl.when(j == pl.num_programs(1) - 1)
    def _():
        l = l_sc[...]
        # edge contribution projected through (proj_edge o lin_edge) AFTER
        # aggregation: a single small MXU matmul in the node domain.
        agg = accv_sc[...] + jnp.dot(acce_sc[...].astype(jnp.bfloat16),
                                     wc_ref[...], preferred_element_type=jnp.float32)
        inv_l = pl.reciprocal(jnp.maximum(l, jnp.float32(1e-20)), approx=True)
        # bias term bc * sum_j alpha_ij  (= bc for nodes with >=1 edge, else 0)
        edge_bias = jnp.where(l > 0.0, jnp.float32(1.0), jnp.float32(0.0)) * bc_ref[...]
        out = agg * inv_l + edge_bias + skip_ref[...]
        o_ref[...] = jnp.where(out >= 0.0, out, jnp.float32(0.01) * out)


def pool_fc_kernel(x_ref, pmat_ref, inv_cnt_ref, w_ref, b_ref, o_ref):
    """global_mean_pool (one-hot matmul, padded nodes excluded) + fc_output."""
    pooled = jnp.dot(pmat_ref[...], x_ref[...], preferred_element_type=jnp.float32)
    pooled = pooled * inv_cnt_ref[...]
    o_ref[...] = (jnp.dot(pooled, w_ref[...], preferred_element_type=jnp.float32)
                  + b_ref[...])


# --------------------------------------------------------------------------
# pallas_call wrappers
# --------------------------------------------------------------------------

def _round_up(x, m):
    return ((x + m - 1) // m) * m


def _whole_array_call(kernel, args, out_shape):
    return pl.pallas_call(
        kernel,
        out_shape=out_shape,
        in_specs=[pl.BlockSpec(memory_space=pltpu.MemorySpace.VMEM)
                  for _ in range(len(args))],
        out_specs=pl.BlockSpec(memory_space=pltpu.MemorySpace.VMEM),
    )(*args)


def _preproj(x, lp, tr=128):
    n_pad, din = x.shape
    dout = lp["d_out"]
    d_cat = lp["w_cat"].shape[1]
    d_e = d_cat - 4 * dout
    return pl.pallas_call(
        preproj_kernel,
        out_shape=(jax.ShapeDtypeStruct((n_pad, dout), jnp.bfloat16),   # q
                   jax.ShapeDtypeStruct((n_pad, dout), jnp.bfloat16),   # k
                   jax.ShapeDtypeStruct((n_pad, dout), jnp.bfloat16),   # v
                   jax.ShapeDtypeStruct((n_pad, dout), jnp.float32),    # skip
                   jax.ShapeDtypeStruct((n_pad, d_e), jnp.float32)),    # qe
        grid=(n_pad // tr,),
        in_specs=[pl.BlockSpec((tr, din), lambda i: (i, 0)),
                  pl.BlockSpec((din, d_cat), lambda i: (0, 0)),
                  pl.BlockSpec((1, d_cat), lambda i: (0, 0))],
        out_specs=(pl.BlockSpec((tr, dout), lambda i: (i, 0)),
                   pl.BlockSpec((tr, dout), lambda i: (i, 0)),
                   pl.BlockSpec((tr, dout), lambda i: (i, 0)),
                   pl.BlockSpec((tr, dout), lambda i: (i, 0)),
                   pl.BlockSpec((tr, d_e), lambda i: (i, 0))),
        compiler_params=pltpu.CompilerParams(dimension_semantics=("parallel",)),
    )(x, lp["w_cat"], lp["b_cat"])


def _tconv_flash(q, k, v, qe, skip, e_raw, mask, wc, bc, tm, tk):
    n_pad, dout = q.shape
    d_e = qe.shape[1]
    grid = (n_pad // tm, n_pad // tk)
    flops = 4.0 * n_pad * n_pad * (dout + d_e) + 2.0 * n_pad * d_e * dout
    bytes_accessed = (n_pad * n_pad * (2 * d_e + 4)
                      + n_pad * (3 * 2 * dout + 4 * d_e + 4 * dout)
                      + n_pad * 4 * dout)
    cost = pl.CostEstimate(flops=int(flops),
                           transcendentals=int(n_pad * n_pad),
                           bytes_accessed=int(bytes_accessed))
    # TODO(synk): for k-NN-sparse protein graphs, a block-sparse src-tile skip
    # via PrefetchScalarGridSpec (per-dst neighbour tile lists in SMEM) would
    # avoid fetching/computing fully-masked tiles; dense masked tiles here.
    return pl.pallas_call(
        tconv_flash_kernel,
        out_shape=jax.ShapeDtypeStruct((n_pad, dout), jnp.float32),
        grid=grid,
        in_specs=[pl.BlockSpec((tm, dout), lambda i, j: (i, 0)),        # q
                  pl.BlockSpec((tk, dout), lambda i, j: (j, 0)),        # k
                  pl.BlockSpec((tk, dout), lambda i, j: (j, 0)),        # v
                  pl.BlockSpec((tm, d_e), lambda i, j: (i, 0)),         # qe
                  pl.BlockSpec((tm, dout), lambda i, j: (i, 0)),        # skip
                  pl.BlockSpec((tm, tk, d_e), lambda i, j: (i, j, 0)),  # e_raw
                  pl.BlockSpec((tm, tk), lambda i, j: (i, j)),          # mask
                  pl.BlockSpec((d_e, dout), lambda i, j: (0, 0)),       # Wc
                  pl.BlockSpec((1, dout), lambda i, j: (0, 0))],        # bc
        out_specs=pl.BlockSpec((tm, dout), lambda i, j: (i, 0)),
        scratch_shapes=[pltpu.VMEM((tm, 1), jnp.float32),
                        pltpu.VMEM((tm, 1), jnp.float32),
                        pltpu.VMEM((tm, dout), jnp.float32),
                        pltpu.VMEM((tm, d_e), jnp.float32)],
        compiler_params=pltpu.CompilerParams(
            dimension_semantics=("parallel", "arbitrary"),
            vmem_limit_bytes=48 * 1024 * 1024),
        cost_estimate=cost,
    )(q, k, v, qe, skip, e_raw, mask, wc, bc)


# --------------------------------------------------------------------------
# Parameters (deterministic, synthetic — no checkpoint loading)
# --------------------------------------------------------------------------

def _linear_init(key, fan_in, fan_out):
    kw, kb = jax.random.split(key)
    bound = 1.0 / math.sqrt(fan_in)
    w = jax.random.uniform(kw, (fan_in, fan_out), jnp.float32, -bound, bound)
    b = jax.random.uniform(kb, (1, fan_out), jnp.float32, -bound, bound)
    return w, b


def init_params(key, d_vocab=21, d_embed=20, d_dihedrals=6, d_edge=39,
                d_gcn=(128, 256, 256), d_out=1):
    keys = jax.random.split(key, 16)
    p = {"embed": jax.random.normal(keys[0], (d_vocab, d_embed), jnp.float32)}

    w, b = _linear_init(keys[1], d_embed + d_dihedrals, d_gcn[0])
    p["proj_node_w_emb"] = w[:d_embed]            # pre-split at init
    p["proj_node_w_s"] = w[d_embed:]
    p["proj_node_b"] = b

    # proj_edge weights are never used standalone at runtime: they are folded
    # (in f32) into per-layer composites with each layer's lin_edge.
    w_pe, b_pe = _linear_init(keys[2], d_edge, d_gcn[0])

    sizes = [d_gcn[0]] + list(d_gcn)
    p["gcn"] = []
    for i in range(len(sizes) - 1):
        din, dout = sizes[i], sizes[i + 1]
        ks = jax.random.split(keys[3 + i], 6)
        wq, bq = _linear_init(ks[0], din, dout)
        wk, bk = _linear_init(ks[1], din, dout)
        wv, bv = _linear_init(ks[2], din, dout)
        we, _ = _linear_init(ks[3], d_gcn[0], dout)   # lin_edge has bias=False
        ws, bs = _linear_init(ks[4], din, dout)
        # f32 composites: we(proj_edge(e_raw)) = e_raw @ wc + bc
        wc = w_pe @ we                                # (d_edge, dout)
        bc = b_pe @ we                                # (1, dout)
        wqe = wq @ wc.T                               # (din, d_edge): qe = x@wqe + bq@wc^T
        bqe = bq @ wc.T                               # (1, d_edge)
        w_cat = jnp.concatenate([wq, wk, wv, ws, wqe], axis=1).astype(jnp.bfloat16)
        b_cat = jnp.concatenate([bq, bk, bv, bs, bqe], axis=1)
        p["gcn"].append(dict(w_cat=w_cat, b_cat=b_cat,
                             wc=wc.astype(jnp.bfloat16), bc=bc, d_out=dout))
    # TODO(synk): fc_output is used in the reference forward() but never defined
    # in __init__; implemented here deterministically as Linear(d_gcn[-1], 1).
    p["fc_w"], p["fc_b"] = _linear_init(keys[10], d_gcn[-1], d_out)
    return p


# --------------------------------------------------------------------------
# Forward pass (glue in plain JAX, hot paths in Pallas kernels)
# --------------------------------------------------------------------------

def prot3d_forward(params, seq, node_s, edge_index, edge_s, batch, num_graphs,
                   *, tile_dst=128, tile_src=128):
    n = int(seq.shape[0])
    c = params["proj_node_w_emb"].shape[1]                 # d_gcn_in = 128
    d_e = edge_s.shape[-1]                                 # raw edge dim = 39
    n_pad = _round_up(n, max(tile_dst, tile_src))
    assert n_pad % tile_dst == 0 and n_pad % tile_src == 0
    pad = n_pad - n

    # Dense adjacency build (glue).  Assumes unique (src, dst) edge pairs.
    # RAW 39-dim features stored bf16 — proj_edge is folded into per-layer Wc/bc.
    src, dst = edge_index[0], edge_index[1]
    e_dense = jnp.zeros((n_pad, n_pad, d_e), jnp.bfloat16
                        ).at[dst, src].set(edge_s.astype(jnp.bfloat16))
    adj_mask = jnp.zeros((n_pad, n_pad), jnp.float32).at[dst, src].set(1.0)

    # Embedding lookup as a wrapper-side gather (no one-hot matmul) + proj_node.
    x_emb = jnp.take(params["embed"], seq.astype(jnp.int32), axis=0)
    x_emb = jnp.pad(x_emb, ((0, pad), (0, 0)))
    s_pad = jnp.pad(node_s.astype(jnp.float32), ((0, pad), (0, 0)))
    x = _whole_array_call(
        node_proj_kernel,
        (x_emb, s_pad, params["proj_node_w_emb"], params["proj_node_w_s"],
         params["proj_node_b"]),
        jax.ShapeDtypeStruct((n_pad, c), jnp.float32))

    # 3 x (TransformerConv + LeakyReLU), flash-style tiled, edge projections
    # factored out of the pair domain.
    for lp in params["gcn"]:
        q, k, v, skip, qe = _preproj(x, lp)
        x = _tconv_flash(q, k, v, qe, skip, e_dense, adj_mask, lp["wc"], lp["bc"],
                         tile_dst, tile_src)

    # global_mean_pool + fc_output (padded nodes get batch id -1 -> excluded).
    batch_pad = jnp.concatenate(
        [batch.astype(jnp.int32), jnp.full((pad,), -1, jnp.int32)])
    pmat = (batch_pad[None, :] ==
            jnp.arange(num_graphs, dtype=jnp.int32)[:, None]).astype(jnp.float32)
    cnt = jnp.maximum(jnp.sum(pmat, axis=1, keepdims=True), 1.0)
    out = _whole_array_call(
        pool_fc_kernel,
        (x, pmat, 1.0 / cnt, params["fc_w"], params["fc_b"]),
        jax.ShapeDtypeStruct((num_graphs, params["fc_w"].shape[1]), jnp.float32))
    return out


# --------------------------------------------------------------------------
# Demo
# --------------------------------------------------------------------------

if __name__ == "__main__":
    NUM_GRAPHS = 2
    NODES_PER_GRAPH = 72          # 144 nodes total -> padded to 256 -> 2x2 flash grid
    EDGES_PER_GRAPH = 288
    D_VOCAB, D_DIHEDRALS, D_EDGE = 21, 6, 39
    N_NODES = NUM_GRAPHS * NODES_PER_GRAPH

    key = jax.random.PRNGKey(0)
    k_seq, k_s, k_e, k_es, k_par = jax.random.split(key, 5)

    seq = jax.random.randint(k_seq, (N_NODES,), 0, D_VOCAB, dtype=jnp.int32)
    node_s = jax.random.normal(k_s, (N_NODES, D_DIHEDRALS), jnp.float32)

    # directed edges (src -> dst) within each graph
    e_keys = jax.random.split(k_e, NUM_GRAPHS)
    edge_blocks = []
    for g in range(NUM_GRAPHS):
        eg = jax.random.randint(e_keys[g], (2, EDGES_PER_GRAPH), 0,
                                NODES_PER_GRAPH, dtype=jnp.int32)
        edge_blocks.append(eg + g * NODES_PER_GRAPH)
    edge_index = jnp.concatenate(edge_blocks, axis=1)             # (2, E)
    edge_s = jax.random.normal(k_es, (edge_index.shape[1], D_EDGE), jnp.float32)

    batch = jnp.repeat(jnp.arange(NUM_GRAPHS, dtype=jnp.int32), NODES_PER_GRAPH)

    params = init_params(k_par)

    out = prot3d_forward(params, seq, node_s, edge_index, edge_s, batch, NUM_GRAPHS)
    out = jax.block_until_ready(out)
    assert out.shape == (NUM_GRAPHS, 1) and out.dtype == jnp.float32
    assert bool(jnp.all(jnp.isfinite(out)))
    print("KERNEL_OK")
</pallas_src>

<mosaic_0001>
module attributes {stable_mosaic.version = 11 : i64} {
  func.func @node_proj_kernel(%arg0: memref<256x20xf32, #tpu.memory_space<vmem>>, %arg1: memref<256x6xf32, #tpu.memory_space<vmem>>, %arg2: memref<20x128xf32, #tpu.memory_space<vmem>>, %arg3: memref<6x128xf32, #tpu.memory_space<vmem>>, %arg4: memref<1x128xf32, #tpu.memory_space<vmem>>, %arg5: memref<256x128xf32, #tpu.memory_space<vmem>>) attributes {dimension_semantics = [], scalar_prefetch = 0 : i64, scratch_operands = 0 : i64, tpu.core_type = #tpu.core_type<tc>} {
    %c0 = arith.constant 0 : index
    %c0_0 = arith.constant 0 : index
    %0 = vector.load %arg0[%c0, %c0_0] : memref<256x20xf32, #tpu.memory_space<vmem>>, vector<256x20xf32>
    %c0_1 = arith.constant 0 : index
    %c0_2 = arith.constant 0 : index
    %1 = vector.load %arg2[%c0_1, %c0_2] : memref<20x128xf32, #tpu.memory_space<vmem>>, vector<20x128xf32>
    %cst = arith.constant dense<0.000000e+00> : vector<256x128xf32>
    %2 = tpu.matmul %0, %1, %cst {dimension_numbers = #tpu.dot_dimension_numbers<[1], [0], [0], [1], [0, 0, 1, 1], [], []>} : vector<256x20xf32>, vector<20x128xf32>, vector<256x128xf32> -> vector<256x128xf32>
    %c0_3 = arith.constant 0 : index
    %c0_4 = arith.constant 0 : index
    %3 = vector.load %arg1[%c0_3, %c0_4] : memref<256x6xf32, #tpu.memory_space<vmem>>, vector<256x6xf32>
    %c0_5 = arith.constant 0 : index
    %c0_6 = arith.constant 0 : index
    %4 = vector.load %arg3[%c0_5, %c0_6] : memref<6x128xf32, #tpu.memory_space<vmem>>, vector<6x128xf32>
    %cst_7 = arith.constant dense<0.000000e+00> : vector<256x128xf32>
    %5 = tpu.matmul %3, %4, %cst_7 {dimension_numbers = #tpu.dot_dimension_numbers<[1], [0], [0], [1], [0, 0, 1, 1], [], []>} : vector<256x6xf32>, vector<6x128xf32>, vector<256x128xf32> -> vector<256x128xf32>
    %6 = arith.addf %2, %5 : vector<256x128xf32>
    %c0_8 = arith.constant 0 : index
    %c0_9 = arith.constant 0 : index
    %7 = vector.load %arg4[%c0_8, %c0_9] : memref<1x128xf32, #tpu.memory_space<vmem>>, vector<1x128xf32>
    %8 = vector.broadcast %7 : vector<1x128xf32> to vector<256x128xf32>
    %9 = arith.addf %6, %8 : vector<256x128xf32>
    %c0_10 = arith.constant 0 : index
    %c0_11 = arith.constant 0 : index
    %10 = vector.load %arg5[%c0_10, %c0_11] : memref<256x128xf32, #tpu.memory_space<vmem>>, vector<256x128xf32>
    tpu.vector_store %arg5[%c0_10, %c0_11], %9 {strides = array<i32>} : memref<256x128xf32, #tpu.memory_space<vmem>>, vector<256x128xf32>,
    return
  }
}

</mosaic_0001>

<llo_original>
// kernel: tpu_custom_call.1
$region0: #{tpu_custom_call.1}
  #allocation0 [shape = 'u32[]', space=smem, size = 0x4, offset = 0x4, fixed_abs, tag = 'smem constant byte address 0x4 - core index']
  #allocation1 [shape = 'u32[144,128]{1,0:T(1,128)}', space=vmem, size = 0x12000, scoped, tag = 'internal scratch']
  %s0 = inlined_call_operand.vmem [shape: f32[256,20], index: 0, kind: input, shape index: {}]
  %s1 = inlined_call_operand.vmem [shape: f32[256,6], index: 1, kind: input, shape index: {}]
  %s2 = inlined_call_operand.vmem [shape: f32[20,128], index: 2, kind: input, shape index: {}]
  %s3 = inlined_call_operand.vmem [shape: f32[6,128], index: 3, kind: input, shape index: {}]
  %s4 = inlined_call_operand.vmem [shape: f32[1,128], index: 4, kind: input, shape index: {}]
  %s5 = inlined_call_operand.hbm [shape: f32[256,128], index: 5, kind: output, shape index: {}]
  %s6 = sld [smem:[#allocation0]]
  $region30: #{tpu_custom_call.1} parent=0
    _
  %s8 = ssub.s32 1, %s6
  %s9 = scalar_select 0, %s8, %s6
  $region1: #{tpu_custom_call.1} parent=0
    #allocation2 [shape = 'u8[131072]{0}', space=vmem, size = 0x20000, scoped, tag = 'output window, operand 0, single buffered']
    #allocation3 [shape = 's32[1]{0}', space=sflag, size = 0x4, scoped, tag = 'scoped memory for tpu_custom_call.1']
    %10 = vsyncpa [#allocation3], 0
    // Predicated region
    $region2: #{tpu_custom_call.1} parent=1 // pred_check
      _
    $region3: #{tpu_custom_call.1} parent=1 // pred_check_branch
      %12 = sbr.rel (0) target = $region5
    $region4: #{tpu_custom_call.1} parent=1 // pred_region
      _
    $region5: #{tpu_custom_call.1} parent=1 // pred_fallthru
      _
    // Predicated region
    $region6: #{tpu_custom_call.1} parent=1 // pred_check
      _
    $region7: #{tpu_custom_call.1} parent=1 // pred_check_branch
      %14 = sbr.rel (0) target = $region9
    $region8: #{tpu_custom_call.1} parent=1 // pred_region
      _
    $region9: #{tpu_custom_call.1} parent=1 // pred_fallthru
      _
    // Predicated region
    $region10: #{tpu_custom_call.1} parent=1 // pred_check
      _
    $region11: #{tpu_custom_call.1} parent=1 // pred_check_branch
      %16 = sbr.rel (0) target = $region13
    $region12: #{tpu_custom_call.1} parent=1 // pred_region
      _
    $region13: #{tpu_custom_call.1} parent=1 // pred_fallthru
      _
    // Predicated region
    $region14: #{tpu_custom_call.1} parent=1 // pred_check
      _
    $region15: #{tpu_custom_call.1} parent=1 // pred_check_branch
      %18 = sbr.rel (0) target = $region17
    $region16: #{tpu_custom_call.1} parent=1 // pred_region
      _
    $region17: #{tpu_custom_call.1} parent=1 // pred_fallthru
      _
    // Predicated region
    $region18: #{tpu_custom_call.1} parent=1 // pred_check
      _
    $region19: #{tpu_custom_call.1} parent=1 // pred_check_branch
      %20 = sbr.rel (0) target = $region21
    $region20: #{tpu_custom_call.1} parent=1 // pred_region
      _
    $region21: #{tpu_custom_call.1} parent=1 // pred_fallthru
      _
    %v21 = vld [vmem:[%s0] sm:$0xff]
    %v22 = vld [vmem:[%s0 + $0x8] sm:$0xff]
    %v23 = vld [vmem:[%s0 + $0x10] sm:$0xff]
    %v24 = vld [vmem:[%s0 + $0x18] sm:$0xff]
    %v25 = vld [vmem:[%s0 + $0x20] sm:$0xff]
    %v26 = vld [vmem:[%s0 + $0x28] sm:$0xff]
    %v27 = vld [vmem:[%s0 + $0x30] sm:$0xff]
    %v28 = vld [vmem:[%s0 + $0x38] sm:$0xff]
    %v29 = vld [vmem:[%s0 + $0x40] sm:$0xff]
    %v30 = vld [vmem:[%s0 + $0x48] sm:$0xff]
    %v31 = vld [vmem:[%s0 + $0x50] sm:$0xff]
    %v32 = vld [vmem:[%s0 + $0x58] sm:$0xff]
    %v33 = vld [vmem:[%s0 + $0x60] sm:$0xff]
    %v34 = vld [vmem:[%s0 + $0x68] sm:$0xff]
    %v35 = vld [vmem:[%s0 + $0x70] sm:$0xff]
    %v36 = vld [vmem:[%s0 + $0x78] sm:$0xff]
    %v37 = vld [vmem:[%s0 + $0x80] sm:$0xff]
    %v38 = vld [vmem:[%s0 + $0x88] sm:$0xff]
    %v39 = vld [vmem:[%s0 + $0x90] sm:$0xff]
    %v40 = vld [vmem:[%s0 + $0x98] sm:$0xff]
    %v41 = vld [vmem:[%s0 + $0xa0] sm:$0xff]
    %v42 = vld [vmem:[%s0 + $0xa8] sm:$0xff]
    %v43 = vld [vmem:[%s0 + $0xb0] sm:$0xff]
    %v44 = vld [vmem:[%s0 + $0xb8] sm:$0xff]
    %v45 = vld [vmem:[%s0 + $0xc0] sm:$0xff]
    %v46 = vld [vmem:[%s0 + $0xc8] sm:$0xff]
    %v47 = vld [vmem:[%s0 + $0xd0] sm:$0xff]
    %v48 = vld [vmem:[%s0 + $0xd8] sm:$0xff]
    %v49 = vld [vmem:[%s0 + $0xe0] sm:$0xff]
    %v50 = vld [vmem:[%s0 + $0xe8] sm:$0xff]
    %v51 = vld [vmem:[%s0 + $0xf0] sm:$0xff]
    %v52 = vld [vmem:[%s0 + $0xf8] sm:$0xff]
    %v53 = vld [vmem:[%s2] sm:$0xff]
    %v54 = vld [vmem:[%s2 + $0x8] sm:$0xff]
    %v55 = vld [vmem:[%s2 + $0x10] sm:$0xf]
    %v56 = vld [vmem:[%s1] sm:$0xff]
    %v57 = vld [vmem:[%s1 + $0x8] sm:$0xff]
    %v58 = vld [vmem:[%s1 + $0x10] sm:$0xff]
    %v59 = vld [vmem:[%s1 + $0x18] sm:$0xff]
    %v60 = vld [vmem:[%s1 + $0x20] sm:$0xff]
    %v61 = vld [vmem:[%s1 + $0x28] sm:$0xff]
    %v62 = vld [vmem:[%s1 + $0x30] sm:$0xff]
    %v63 = vld [vmem:[%s1 + $0x38] sm:$0xff]
    %v64 = vld [vmem:[%s1 + $0x40] sm:$0xff]
    %v65 = vld [vmem:[%s1 + $0x48] sm:$0xff]
    %v66 = vld [vmem:[%s1 + $0x50] sm:$0xff]
    %v67 = vld [vmem:[%s1 + $0x58] sm:$0xff]
    %v68 = vld [vmem:[%s1 + $0x60] sm:$0xff]
    %v69 = vld [vmem:[%s1 + $0x68] sm:$0xff]
    %v70 = vld [vmem:[%s1 + $0x70] sm:$0xff]
    %v71 = vld [vmem:[%s1 + $0x78] sm:$0xff]
    %v72 = vld [vmem:[%s1 + $0x80] sm:$0xff]
    %v73 = vld [vmem:[%s1 + $0x88] sm:$0xff]
    %v74 = vld [vmem:[%s1 + $0x90] sm:$0xff]
    %v75 = vld [vmem:[%s1 + $0x98] sm:$0xff]
    %v76 = vld [vmem:[%s1 + $0xa0] sm:$0xff]
    %v77 = vld [vmem:[%s1 + $0xa8] sm:$0xff]
    %v78 = vld [vmem:[%s1 + $0xb0] sm:$0xff]
    %v79 = vld [vmem:[%s1 + $0xb8] sm:$0xff]
    %v80 = vld [vmem:[%s1 + $0xc0] sm:$0xff]
    %v81 = vld [vmem:[%s1 + $0xc8] sm:$0xff]
    %v82 = vld [vmem:[%s1 + $0xd0] sm:$0xff]
    %v83 = vld [vmem:[%s1 + $0xd8] sm:$0xff]
    %v84 = vld [vmem:[%s1 + $0xe0] sm:$0xff]
    %v85 = vld [vmem:[%s1 + $0xe8] sm:$0xff]
    %v86 = vld [vmem:[%s1 + $0xf0] sm:$0xff]
    %v87 = vld [vmem:[%s1 + $0xf8] sm:$0xff]
    %v88 = vld [vmem:[%s3] sm:$0x3f]
    %vm89 = vcmask 48128
    %v91 = vsel %vm89, %v56, 0
    %v94 = vsel %vm89, %v57, 0
    %v97 = vsel %vm89, %v58, 0
    %v100 = vsel %vm89, %v59, 0
    %v103 = vsel %vm89, %v60, 0
    %v106 = vsel %vm89, %v61, 0
    %v109 = vsel %vm89, %v62, 0
    %v112 = vsel %vm89, %v63, 0
    %v115 = vsel %vm89, %v64, 0
    %v118 = vsel %vm89, %v65, 0
    %v121 = vsel %vm89, %v66, 0
    %v124 = vsel %vm89, %v67, 0
    %v127 = vsel %vm89, %v68, 0
    %v130 = vsel %vm89, %v69, 0
    %v133 = vsel %vm89, %v70, 0
    %v136 = vsel %vm89, %v71, 0
    %v139 = vsel %vm89, %v72, 0
    %v142 = vsel %vm89, %v73, 0
    %v145 = vsel %vm89, %v74, 0
    %v148 = vsel %vm89, %v75, 0
    %v151 = vsel %vm89, %v76, 0
    %v154 = vsel %vm89, %v77, 0
    %v157 = vsel %vm89, %v78, 0
    %v160 = vsel %vm89, %v79, 0
    %v163 = vsel %vm89, %v80, 0
    %v166 = vsel %vm89, %v81, 0
    %v169 = vsel %vm89, %v82, 0
    %v172 = vsel %vm89, %v83, 0
    %v175 = vsel %vm89, %v84, 0
    %v178 = vsel %vm89, %v85, 0
    %v181 = vsel %vm89, %v86, 0
    %v184 = vsel %vm89, %v87, 0
    %vm186 = vcmask 1045504
    %v188 = vsel %vm186, %v88, 0
    %190 = vmatprep.subr.mxu0 0.0
    %191 = vmatpush1.msra.mxu0 %v188
    %192 = vmatprep.subr.mxu0 0.0
    %193 = vmatpush1.msra.mxu0 0.0
    %194 = vmatprep.subr.mxu0 0.0
    %195 = vmatpush1.msra.mxu0 0.0
    %196 = vmatprep.subr.mxu0 0.0
    %197 = vmatpush1.msra.mxu0 0.0
    %198 = vmatprep.subr.mxu0 0.0
    %199 = vmatpush1.msra.mxu0 0.0
    %200 = vmatprep.subr.mxu0 0.0
    %201 = vmatpush1.msra.mxu0 0.0
    %202 = vmatprep.subr.mxu0 0.0
    %203 = vmatpush1.msra.mxu0 0.0
    %204 = vmatprep.subr.mxu0 0.0
    %205 = vmatpush1.msra.mxu0 0.0
    %206 = vmatprep.subr.mxu0 0.0
    %207 = vmatpush1.msra.mxu0 0.0
    %208 = vmatprep.subr.mxu0 0.0
    %209 = vmatpush1.msra.mxu0 0.0
    %210 = vmatprep.subr.mxu0 0.0
    %211 = vmatpush1.msra.mxu0 0.0
    %212 = vmatprep.subr.mxu0 0.0
    %213 = vmatpush1.msra.mxu0 0.0
    %214 = vmatprep.subr.mxu0 0.0
    %215 = vmatpush1.msra.mxu0 0.0
    %216 = vmatprep.subr.mxu0 0.0
    %217 = vmatpush1.msra.mxu0 0.0
    %218 = vmatprep.subr.mxu0 0.0
    %219 = vmatpush1.msra.mxu0 0.0
    %220 = vmatprep.subr.mxu0 0.0
    %221 = vmatpush1.msra.mxu0 0.0
    %222 = vmatprep.subr.mxu0 0.0
    %223 = vmatpush1.msra.mxu0 0.0
    %224 = vmatprep.subr.mxu0 0.0
    %225 = vmatpush1.msra.mxu0 0.0
    %226 = vmatprep.subr.mxu0 0.0
    %227 = vmatpush1.msra.mxu0 0.0
    %228 = vmatprep.subr.mxu0 0.0
    %229 = vmatpush1.msra.mxu0 0.0
    %230 = vmatprep.subr.mxu0 0.0
    %231 = vmatpush1.msra.mxu0 0.0
    %232 = vmatprep.subr.mxu0 0.0
    %233 = vmatpush1.msra.mxu0 0.0
    %234 = vmatprep.subr.mxu0 0.0
    %235 = vmatpush1.msra.mxu0 0.0
    %236 = vmatprep.subr.mxu0 0.0
    %237 = vmatpush1.msra.mxu0 0.0
    %238 = vmatprep.subr.mxu0 0.0
    %239 = vmatpush1.msra.mxu0 0.0
    %240 = vmatprep.subr.mxu0 0.0
    %241 = vmatpush1.msra.mxu0 0.0
    %242 = vmatprep.subr.mxu0 0.0
    %243 = vmatpush1.msra.mxu0 0.0
    %244 = vmatprep.subr.mxu0 0.0
    %245 = vmatpush1.msra.mxu0 0.0
    %246 = vmatprep.subr.mxu0 0.0
    %247 = vmatpush1.msra.mxu0 0.0
    %248 = vmatprep.subr.mxu0 0.0
    %249 = vmatpush1.msra.mxu0 0.0
    %250 = vmatprep.subr.mxu0 0.0
    %251 = vmatpush1.msra.mxu0 0.0
    %252 = vmatprep.subr.mxu0 0.0
    %253 = vmatpush1.msra.mxu0 0.0
    %254 = vmatprep.mubr.f32.mxu0 0.0
    %255 = vmatmul.mubr.f32.gmra.mrb[0].mxu0 %v91
    %v256 = vpop.f32.mrb[0].mxu0
    %v257 = vadd.f32 0.0, %v256
    %v258 = vpop.f32.mrb[0].mxu0
    %259 = vmatprep.mubr.f32.mxu0 0.0
    %260 = vmatmul.mubr.f32.gmra.mrb[0].mxu0 %v94
    %v261 = vpop.f32.mrb[0].mxu0
    %v262 = vadd.f32 0.0, %v261
    %v263 = vpop.f32.mrb[0].mxu0
    %264 = vmatprep.mubr.f32.mxu0 0.0
    %265 = vmatmul.mubr.f32.gmra.mrb[0].mxu0 %v97
    %v266 = vpop.f32.mrb[0].mxu0
    %v267 = vadd.f32 0.0, %v266
    %v268 = vpop.f32.mrb[0].mxu0
    %269 = vmatprep.mubr.f32.mxu0 0.0
    %270 = vmatmul.mubr.f32.gmra.mrb[0].mxu0 %v100
    %v271 = vpop.f32.mrb[0].mxu0
    %v272 = vadd.f32 0.0, %v271
    %v273 = vpop.f32.mrb[0].mxu0
    %274 = vmatprep.mubr.f32.mxu0 0.0
    %275 = vmatmul.mubr.f32.gmra.mrb[0].mxu0 %v103
    %v276 = vpop.f32.mrb[0].mxu0
    %v277 = vadd.f32 0.0, %v276
    %v278 = vpop.f32.mrb[0].mxu0
    %279 = vmatprep.mubr.f32.mxu0 0.0
    %280 = vmatmul.mubr.f32.gmra.mrb[0].mxu0 %v106
    %v281 = vpop.f32.mrb[0].mxu0
    %v282 = vadd.f32 0.0, %v281
    %v283 = vpop.f32.mrb[0].mxu0
    %284 = vmatprep.mubr.f32.mxu0 0.0
    %285 = vmatmul.mubr.f32.gmra.mrb[0].mxu0 %v109
    %v286 = vpop.f32.mrb[0].mxu0
    %v287 = vadd.f32 0.0, %v286
    %v288 = vpop.f32.mrb[0].mxu0
    %289 = vmatprep.mubr.f32.mxu0 0.0
    %290 = vmatmul.mubr.f32.gmra.mrb[0].mxu0 %v112
    %v291 = vpop.f32.mrb[0].mxu0
    %v292 = vadd.f32 0.0, %v291
    %v293 = vpop.f32.mrb[0].mxu0
    %294 = vmatprep.mubr.f32.mxu0 0.0
    %295 = vmatmul.mubr.f32.gmra.mrb[0].mxu0 %v115
    %v296 = vpop.f32.mrb[0].mxu0
    %v297 = vadd.f32 0.0, %v296
    %v298 = vpop.f32.mrb[0].mxu0
    %299 = vmatprep.mubr.f32.mxu0 0.0
    %300 = vmatmul.mubr.f32.gmra.mrb[0].mxu0 %v118
    %v301 = vpop.f32.mrb[0].mxu0
    %v302 = vadd.f32 0.0, %v301
    %v303 = vpop.f32.mrb[0].mxu0
    %304 = vmatprep.mubr.f32.mxu0 0.0
    %305 = vmatmul.mubr.f32.gmra.mrb[0].mxu0 %v121
    %v306 = vpop.f32.mrb[0].mxu0
    %v307 = vadd.f32 0.0, %v306
    %v308 = vpop.f32.mrb[0].mxu0
    %309 = vmatprep.mubr.f32.mxu0 0.0
    %310 = vmatmul.mubr.f32.gmra.mrb[0].mxu0 %v124
    %v311 = vpop.f32.mrb[0].mxu0
    %v312 = vadd.f32 0.0, %v311
    %v313 = vpop.f32.mrb[0].mxu0
    %314 = vmatprep.mubr.f32.mxu0 0.0
    %315 = vmatmul.mubr.f32.gmra.mrb[0].mxu0 %v127
    %v316 = vpop.f32.mrb[0].mxu0
    %v317 = vadd.f32 0.0, %v316
    %v318 = vpop.f32.mrb[0].mxu0
    %319 = vmatprep.mubr.f32.mxu0 0.0
    %320 = vmatmul.mubr.f32.gmra.mrb[0].mxu0 %v130
    %v321 = vpop.f32.mrb[0].mxu0
    %v322 = vadd.f32 0.0, %v321
    %v323 = vpop.f32.mrb[0].mxu0
    %324 = vmatprep.mubr.f32.mxu0 0.0
    %325 = vmatmul.mubr.f32.gmra.mrb[0].mxu0 %v133
    %v326 = vpop.f32.mrb[0].mxu0
    %v327 = vadd.f32 0.0, %v326
    %v328 = vpop.f32.mrb[0].mxu0
    %329 = vmatprep.mubr.f32.mxu0 0.0
    %330 = vmatmul.mubr.f32.gmra.mrb[0].mxu0 %v136
    %v331 = vpop.f32.mrb[0].mxu0
    %v332 = vadd.f32 0.0, %v331
    %v333 = vpop.f32.mrb[0].mxu0
    %334 = vmatprep.mubr.f32.mxu0 0.0
    %335 = vmatmul.mubr.f32.gmra.mrb[0].mxu0 %v139
    %v336 = vpop.f32.mrb[0].mxu0
    %v337 = vadd.f32 0.0, %v336
    %v338 = vpop.f32.mrb[0].mxu0
    %339 = vmatprep.mubr.f32.mxu0 0.0
    %340 = vmatmul.mubr.f32.gmra.mrb[0].mxu0 %v142
    %v341 = vpop.f32.mrb[0].mxu0
    %v342 = vadd.f32 0.0, %v341
    %v343 = vpop.f32.mrb[0].mxu0
    %344 = vmatprep.mubr.f32.mxu0 0.0
    %345 = vmatmul.mubr.f32.gmra.mrb[0].mxu0 %v145
    %v346 = vpop.f32.mrb[0].mxu0
    %v347 = vadd.f32 0.0, %v346
    %v348 = vpop.f32.mrb[0].mxu0
    %349 = vmatprep.mubr.f32.mxu0 0.0
    %350 = vmatmul.mubr.f32.gmra.mrb[0].mxu0 %v148
    %v351 = vpop.f32.mrb[0].mxu0
    %v352 = vadd.f32 0.0, %v351
    %v353 = vpop.f32.mrb[0].mxu0
    %354 = vmatprep.mubr.f32.mxu0 0.0
    %355 = vmatmul.mubr.f32.gmra.mrb[0].mxu0 %v151
    %v356 = vpop.f32.mrb[0].mxu0
    %v357 = vadd.f32 0.0, %v356
    %v358 = vpop.f32.mrb[0].mxu0
    %359 = vmatprep.mubr.f32.mxu0 0.0
    %360 = vmatmul.mubr.f32.gmra.mrb[0].mxu0 %v154
    %v361 = vpop.f32.mrb[0].mxu0
    %v362 = vadd.f32 0.0, %v361
    %v363 = vpop.f32.mrb[0].mxu0
    %364 = vmatprep.mubr.f32.mxu0 0.0
    %365 = vmatmul.mubr.f32.gmra.mrb[0].mxu0 %v157
    %v366 = vpop.f32.mrb[0].mxu0
    %v367 = vadd.f32 0.0, %v366
    %v368 = vpop.f32.mrb[0].mxu0
    %369 = vmatprep.mubr.f32.mxu0 0.0
    %370 = vmatmul.mubr.f32.gmra.mrb[0].mxu0 %v160
    %v371 = vpop.f32.mrb[0].mxu0
    %v372 = vadd.f32 0.0, %v371
    %v373 = vpop.f32.mrb[0].mxu0
    %374 = vmatprep.mubr.f32.mxu0 0.0
    %375 = vmatmul.mubr.f32.gmra.mrb[0].mxu0 %v163
    %v376 = vpop.f32.mrb[0].mxu0
    %v377 = vadd.f32 0.0, %v376
    %v378 = vpop.f32.mrb[0].mxu0
    %379 = vmatprep.mubr.f32.mxu0 0.0
    %380 = vmatmul.mubr.f32.gmra.mrb[0].mxu0 %v166
    %v381 = vpop.f32.mrb[0].mxu0
    %v382 = vadd.f32 0.0, %v381
    %v383 = vpop.f32.mrb[0].mxu0
    %384 = vmatprep.mubr.f32.mxu0 0.0
    %385 = vmatmul.mubr.f32.gmra.mrb[0].mxu0 %v169
    %v386 = vpop.f32.mrb[0].mxu0
    %v387 = vadd.f32 0.0, %v386
    %v388 = vpop.f32.mrb[0].mxu0
    %389 = vmatprep.mubr.f32.mxu0 0.0
    %390 = vmatmul.mubr.f32.gmra.mrb[0].mxu0 %v172
    %v391 = vpop.f32.mrb[0].mxu0
    %v392 = vadd.f32 0.0, %v391
    %v393 = vpop.f32.mrb[0].mxu0
    %394 = vmatprep.mubr.f32.mxu0 0.0
    %395 = vmatmul.mubr.f32.gmra.mrb[0].mxu0 %v175
    %v396 = vpop.f32.mrb[0].mxu0
    %v397 = vadd.f32 0.0, %v396
    %v398 = vpop.f32.mrb[0].mxu0
    %399 = vmatprep.mubr.f32.mxu0 0.0
    %400 = vmatmul.mubr.f32.gmra.mrb[0].mxu0 %v178
    %v401 = vpop.f32.mrb[0].mxu0
    %v402 = vadd.f32 0.0, %v401
    %v403 = vpop.f32.mrb[0].mxu0
    %404 = vmatprep.mubr.f32.mxu0 0.0
    %405 = vmatmul.mubr.f32.gmra.mrb[0].mxu0 %v181
    %v406 = vpop.f32.mrb[0].mxu0
    %v407 = vadd.f32 0.0, %v406
    %v408 = vpop.f32.mrb[0].mxu0
    %409 = vmatprep.mubr.f32.mxu0 0.0
    %410 = vmatmul.mubr.f32.gmra.mrb[0].mxu0 %v184
    %v411 = vpop.f32.mrb[0].mxu0
    %v412 = vadd.f32 0.0, %v411
    %v413 = vpop.f32.mrb[0].mxu0
    %414 = vdwg.mxu0
    %vm415 = vcmask 162816
    %v417 = vsel %vm415, %v21, 0
    %v420 = vsel %vm415, %v22, 0
    %v423 = vsel %vm415, %v23, 0
    %v426 = vsel %vm415, %v24, 0
    %v429 = vsel %vm415, %v25, 0
    %v432 = vsel %vm415, %v26, 0
    %v435 = vsel %vm415, %v27, 0
    %v438 = vsel %vm415, %v28, 0
    %v441 = vsel %vm415, %v29, 0
    %v444 = vsel %vm415, %v30, 0
    %v447 = vsel %vm415, %v31, 0
    %v450 = vsel %vm415, %v32, 0
    %v453 = vsel %vm415, %v33, 0
    %v456 = vsel %vm415, %v34, 0
    %v459 = vsel %vm415, %v35, 0
    %v462 = vsel %vm415, %v36, 0
    %v465 = vsel %vm415, %v37, 0
    %v468 = vsel %vm415, %v38, 0
    %v471 = vsel %vm415, %v39, 0
    %v474 = vsel %vm415, %v40, 0
    %v477 = vsel %vm415, %v41, 0
    %v480 = vsel %vm415, %v42, 0
    %v483 = vsel %vm415, %v43, 0
    %v486 = vsel %vm415, %v44, 0
    %v489 = vsel %vm415, %v45, 0
    %v492 = vsel %vm415, %v46, 0
    %v495 = vsel %vm415, %v47, 0
    %v498 = vsel %vm415, %v48, 0
    %v501 = vsel %vm415, %v49, 0
    %v504 = vsel %vm415, %v50, 0
    %v507 = vsel %vm415, %v51, 0
    %v510 = vsel %vm415, %v52, 0
    %vm512 = vcmask 1043456
    %v514 = vsel %vm512, %v55, 0
    %516 = vmatprep.subr.mxu0 0.0
    %517 = vmatpush1.msra.mxu0 %v53
    %518 = vmatprep.subr.mxu0 0.0
    %519 = vmatpush1.msra.mxu0 %v54
    %520 = vmatprep.subr.mxu0 0.0
    %521 = vmatpush1.msra.mxu0 %v514
    %522 = vmatprep.subr.mxu0 0.0
    %523 = vmatpush1.msra.mxu0 0.0
    %524 = vmatprep.subr.mxu0 0.0
    %525 = vmatpush1.msra.mxu0 0.0
    %526 = vmatprep.subr.mxu0 0.0
    %527 = vmatpush1.msra.mxu0 0.0
    %528 = vmatprep.subr.mxu0 0.0
    %529 = vmatpush1.msra.mxu0 0.0
    %530 = vmatprep.subr.mxu0 0.0
    %531 = vmatpush1.msra.mxu0 0.0
    %532 = vmatprep.subr.mxu0 0.0
    %533 = vmatpush1.msra.mxu0 0.0
    %534 = vmatprep.subr.mxu0 0.0
    %535 = vmatpush1.msra.mxu0 0.0
    %536 = vmatprep.subr.mxu0 0.0
    %537 = vmatpush1.msra.mxu0 0.0
    %538 = vmatprep.subr.mxu0 0.0
    %539 = vmatpush1.msra.mxu0 0.0
    %540 = vmatprep.subr.mxu0 0.0
    %541 = vmatpush1.msra.mxu0 0.0
    %542 = vmatprep.subr.mxu0 0.0
    %543 = vmatpush1.msra.mxu0 0.0
    %544 = vmatprep.subr.mxu0 0.0
    %545 = vmatpush1.msra.mxu0 0.0
    %546 = vmatprep.subr.mxu0 0.0
    %547 = vmatpush1.msra.mxu0 0.0
    %548 = vmatprep.subr.mxu0 0.0
    %549 = vmatpush1.msra.mxu0 0.0
    %550 = vmatprep.subr.mxu0 0.0
    %551 = vmatpush1.msra.mxu0 0.0
    %552 = vmatprep.subr.mxu0 0.0
    %553 = vmatpush1.msra.mxu0 0.0
    %554 = vmatprep.subr.mxu0 0.0
    %555 = vmatpush1.msra.mxu0 0.0
    %556 = vmatprep.subr.mxu0 0.0
    %557 = vmatpush1.msra.mxu0 0.0
    %558 = vmatprep.subr.mxu0 0.0
    %559 = vmatpush1.msra.mxu0 0.0
    %560 = vmatprep.subr.mxu0 0.0
    %561 = vmatpush1.msra.mxu0 0.0
    %562 = vmatprep.subr.mxu0 0.0
    %563 = vmatpush1.msra.mxu0 0.0
    %564 = vmatprep.subr.mxu0 0.0
    %565 = vmatpush1.msra.mxu0 0.0
    %566 = vmatprep.subr.mxu0 0.0
    %567 = vmatpush1.msra.mxu0 0.0
    %568 = vmatprep.subr.mxu0 0.0
    %569 = vmatpush1.msra.mxu0 0.0
    %570 = vmatprep.subr.mxu0 0.0
    %571 = vmatpush1.msra.mxu0 0.0
    %572 = vmatprep.subr.mxu0 0.0
    %573 = vmatpush1.msra.mxu0 0.0
    %574 = vmatprep.subr.mxu0 0.0
    %575 = vmatpush1.msra.mxu0 0.0
    %576 = vmatprep.subr.mxu0 0.0
    %577 = vmatpush1.msra.mxu0 0.0
    %578 = vmatprep.subr.mxu0 0.0
    %579 = vmatpush1.msra.mxu0 0.0
    %580 = vmatprep.mubr.f32.mxu0 0.0
    %581 = vmatmul.mubr.f32.gmra.mrb[0].mxu0 %v417
    %v582 = vpop.f32.mrb[0].mxu0
    %v583 = vadd.f32 %v257, %v582
    %v584 = vpop.f32.mrb[0].mxu0
    %585 = vmatprep.mubr.f32.mxu0 0.0
    %586 = vmatmul.mubr.f32.gmra.mrb[0].mxu0 %v420
    %v587 = vpop.f32.mrb[0].mxu0
    %v588 = vadd.f32 %v262, %v587
    %v589 = vpop.f32.mrb[0].mxu0
    %590 = vmatprep.mubr.f32.mxu0 0.0
    %591 = vmatmul.mubr.f32.gmra.mrb[0].mxu0 %v423
    %v592 = vpop.f32.mrb[0].mxu0
    %v593 = vadd.f32 %v267, %v592
    %v594 = vpop.f32.mrb[0].mxu0
    %595 = vmatprep.mubr.f32.mxu0 0.0
    %596 = vmatmul.mubr.f32.gmra.mrb[0].mxu0 %v426
    %v597 = vpop.f32.mrb[0].mxu0
    %v598 = vadd.f32 %v272, %v597
    %v599 = vpop.f32.mrb[0].mxu0
    %600 = vmatprep.mubr.f32.mxu0 0.0
    %601 = vmatmul.mubr.f32.gmra.mrb[0].mxu0 %v429
    %v602 = vpop.f32.mrb[0].mxu0
    %v603 = vadd.f32 %v277, %v602
    %v604 = vpop.f32.mrb[0].mxu0
    %605 = vmatprep.mubr.f32.mxu0 0.0
    %606 = vmatmul.mubr.f32.gmra.mrb[0].mxu0 %v432
    %v607 = vpop.f32.mrb[0].mxu0
    %v608 = vadd.f32 %v282, %v607
    %v609 = vpop.f32.mrb[0].mxu0
    %610 = vmatprep.mubr.f32.mxu0 0.0
    %611 = vmatmul.mubr.f32.gmra.mrb[0].mxu0 %v435
    %v612 = vpop.f32.mrb[0].mxu0
    %v613 = vadd.f32 %v287, %v612
    %v614 = vpop.f32.mrb[0].mxu0
    %615 = vmatprep.mubr.f32.mxu0 0.0
    %616 = vmatmul.mubr.f32.gmra.mrb[0].mxu0 %v438
    %v617 = vpop.f32.mrb[0].mxu0
    %v618 = vadd.f32 %v292, %v617
    %v619 = vpop.f32.mrb[0].mxu0
    %620 = vmatprep.mubr.f32.mxu0 0.0
    %621 = vmatmul.mubr.f32.gmra.mrb[0].mxu0 %v441
    %v622 = vpop.f32.mrb[0].mxu0
    %v623 = vadd.f32 %v297, %v622
    %v624 = vpop.f32.mrb[0].mxu0
    %625 = vmatprep.mubr.f32.mxu0 0.0
    %626 = vmatmul.mubr.f32.gmra.mrb[0].mxu0 %v444
    %v627 = vpop.f32.mrb[0].mxu0
    %v628 = vadd.f32 %v302, %v627
    %v629 = vpop.f32.mrb[0].mxu0
    %630 = vmatprep.mubr.f32.mxu0 0.0
    %631 = vmatmul.mubr.f32.gmra.mrb[0].mxu0 %v447
    %v632 = vpop.f32.mrb[0].mxu0
    %v633 = vadd.f32 %v307, %v632
    %v634 = vpop.f32.mrb[0].mxu0
    %635 = vmatprep.mubr.f32.mxu0 0.0
    %636 = vmatmul.mubr.f32.gmra.mrb[0].mxu0 %v450
    %v637 = vpop.f32.mrb[0].mxu0
    %v638 = vadd.f32 %v312, %v637
    %v639 = vpop.f32.mrb[0].mxu0
    %640 = vmatprep.mubr.f32.mxu0 0.0
    %641 = vmatmul.mubr.f32.gmra.mrb[0].mxu0 %v453
    %v642 = vpop.f32.mrb[0].mxu0
    %v643 = vadd.f32 %v317, %v642
    %v644 = vpop.f32.mrb[0].mxu0
    %645 = vmatprep.mubr.f32.mxu0 0.0
    %646 = vmatmul.mubr.f32.gmra.mrb[0].mxu0 %v456
    %v647 = vpop.f32.mrb[0].mxu0
    %v648 = vadd.f32 %v322, %v647
    %v649 = vpop.f32.mrb[0].mxu0
    %650 = vmatprep.mubr.f32.mxu0 0.0
    %651 = vmatmul.mubr.f32.gmra.mrb[0].mxu0 %v459
    %v652 = vpop.f32.mrb[0].mxu0
    %v653 = vadd.f32 %v327, %v652
    %v654 = vpop.f32.mrb[0].mxu0
    %655 = vmatprep.mubr.f32.mxu0 0.0
    %656 = vmatmul.mubr.f32.gmra.mrb[0].mxu0 %v462
    %v657 = vpop.f32.mrb[0].mxu0
    %v658 = vadd.f32 %v332, %v657
    %v659 = vpop.f32.mrb[0].mxu0
    %660 = vmatprep.mubr.f32.mxu0 0.0
    %661 = vmatmul.mubr.f32.gmra.mrb[0].mxu0 %v465
    %v662 = vpop.f32.mrb[0].mxu0
    %v663 = vadd.f32 %v337, %v662
    %v664 = vpop.f32.mrb[0].mxu0
    %665 = vmatprep.mubr.f32.mxu0 0.0
    %666 = vmatmul.mubr.f32.gmra.mrb[0].mxu0 %v468
    %v667 = vpop.f32.mrb[0].mxu0
    %v668 = vadd.f32 %v342, %v667
    %v669 = vpop.f32.mrb[0].mxu0
    %670 = vmatprep.mubr.f32.mxu0 0.0
    %671 = vmatmul.mubr.f32.gmra.mrb[0].mxu0 %v471
    %v672 = vpop.f32.mrb[0].mxu0
    %v673 = vadd.f32 %v347, %v672
    %v674 = vpop.f32.mrb[0].mxu0
    %675 = vmatprep.mubr.f32.mxu0 0.0
    %676 = vmatmul.mubr.f32.gmra.mrb[0].mxu0 %v474
    %v677 = vpop.f32.mrb[0].mxu0
    %v678 = vadd.f32 %v352, %v677
    %v679 = vpop.f32.mrb[0].mxu0
    %680 = vmatprep.mubr.f32.mxu0 0.0
    %681 = vmatmul.mubr.f32.gmra.mrb[0].mxu0 %v477
    %v682 = vpop.f32.mrb[0].mxu0
    %v683 = vadd.f32 %v357, %v682
    %v684 = vpop.f32.mrb[0].mxu0
    %685 = vmatprep.mubr.f32.mxu0 0.0
    %686 = vmatmul.mubr.f32.gmra.mrb[0].mxu0 %v480
    %v687 = vpop.f32.mrb[0].mxu0
    %v688 = vadd.f32 %v362, %v687
    %v689 = vpop.f32.mrb[0].mxu0
    %690 = vmatprep.mubr.f32.mxu0 0.0
    %691 = vmatmul.mubr.f32.gmra.mrb[0].mxu0 %v483
    %v692 = vpop.f32.mrb[0].mxu0
    %v693 = vadd.f32 %v367, %v692
    %v694 = vpop.f32.mrb[0].mxu0
    %695 = vmatprep.mubr.f32.mxu0 0.0
    %696 = vmatmul.mubr.f32.gmra.mrb[0].mxu0 %v486
    %v697 = vpop.f32.mrb[0].mxu0
    %v698 = vadd.f32 %v372, %v697
    %v699 = vpop.f32.mrb[0].mxu0
    %700 = vmatprep.mubr.f32.mxu0 0.0
    %701 = vmatmul.mubr.f32.gmra.mrb[0].mxu0 %v489
    %v702 = vpop.f32.mrb[0].mxu0
    %v703 = vadd.f32 %v377, %v702
    %v704 = vpop.f32.mrb[0].mxu0
    %705 = vmatprep.mubr.f32.mxu0 0.0
    %706 = vmatmul.mubr.f32.gmra.mrb[0].mxu0 %v492
    %v707 = vpop.f32.mrb[0].mxu0
    %v708 = vadd.f32 %v382, %v707
    %v709 = vpop.f32.mrb[0].mxu0
    %710 = vmatprep.mubr.f32.mxu0 0.0
    %711 = vmatmul.mubr.f32.gmra.mrb[0].mxu0 %v495
    %v712 = vpop.f32.mrb[0].mxu0
    %v713 = vadd.f32 %v387, %v712
    %v714 = vpop.f32.mrb[0].mxu0
    %715 = vmatprep.mubr.f32.mxu0 0.0
    %716 = vmatmul.mubr.f32.gmra.mrb[0].mxu0 %v498
    %v717 = vpop.f32.mrb[0].mxu0
    %v718 = vadd.f32 %v392, %v717
    %v719 = vpop.f32.mrb[0].mxu0
    %720 = vmatprep.mubr.f32.mxu0 0.0
    %721 = vmatmul.mubr.f32.gmra.mrb[0].mxu0 %v501
    %v722 = vpop.f32.mrb[0].mxu0
    %v723 = vadd.f32 %v397, %v722
    %v724 = vpop.f32.mrb[0].mxu0
    %725 = vmatprep.mubr.f32.mxu0 0.0
    %726 = vmatmul.mubr.f32.gmra.mrb[0].mxu0 %v504
    %v727 = vpop.f32.mrb[0].mxu0
    %v728 = vadd.f32 %v402, %v727
    %v729 = vpop.f32.mrb[0].mxu0
    %730 = vmatprep.mubr.f32.mxu0 0.0
    %731 = vmatmul.mubr.f32.gmra.mrb[0].mxu0 %v507
    %v732 = vpop.f32.mrb[0].mxu0
    %v733 = vadd.f32 %v407, %v732
    %v734 = vpop.f32.mrb[0].mxu0
    %735 = vmatprep.mubr.f32.mxu0 0.0
    %736 = vmatmul.mubr.f32.gmra.mrb[0].mxu0 %v510
    %v737 = vpop.f32.mrb[0].mxu0
    %v738 = vadd.f32 %v412, %v737
    %v739 = vpop.f32.mrb[0].mxu0
    %740 = vdwg.mxu0
    %v741 = vld [vmem:[%s4] sm:$0x1]
    %v743 = vlaneseq
    %v744 = vshrl.u32 %v743, 7
    %v745 = vsub.s32 0, %v744
    %v746 = vrot.slane %v741, %v745
    %v748 = vadd.f32 %v583, %v746
    %v749 = vadd.f32 %v588, %v746
    %v750 = vadd.f32 %v593, %v746
    %v751 = vadd.f32 %v598, %v746
    %v752 = vadd.f32 %v603, %v746
    %v753 = vadd.f32 %v608, %v746
    %v754 = vadd.f32 %v613, %v746
    %v755 = vadd.f32 %v618, %v746
    %v756 = vadd.f32 %v623, %v746
    %v757 = vadd.f32 %v628, %v746
    %v758 = vadd.f32 %v633, %v746
    %v759 = vadd.f32 %v638, %v746
    %v760 = vadd.f32 %v643, %v746
    %v761 = vadd.f32 %v648, %v746
    %v762 = vadd.f32 %v653, %v746
    %v763 = vadd.f32 %v658, %v746
    %v764 = vadd.f32 %v663, %v746
    %v765 = vadd.f32 %v668, %v746
    %v766 = vadd.f32 %v673, %v746
    %v767 = vadd.f32 %v678, %v746
    %v768 = vadd.f32 %v683, %v746
    %v769 = vadd.f32 %v688, %v746
    %v770 = vadd.f32 %v693, %v746
    %v771 = vadd.f32 %v698, %v746
    %v772 = vadd.f32 %v703, %v746
    %v773 = vadd.f32 %v708, %v746
    %v774 = vadd.f32 %v713, %v746
    %v775 = vadd.f32 %v718, %v746
    %v776 = vadd.f32 %v723, %v746
    %v777 = vadd.f32 %v728, %v746
    %v778 = vadd.f32 %v733, %v746
    %v779 = vadd.f32 %v738, %v746
    %780 = vst [vmem:[#allocation2] sm:$0xff] %v748
    %781 = vst [vmem:[#allocation2 + $0x8] sm:$0xff] %v749
    %782 = vst [vmem:[#allocation2 + $0x10] sm:$0xff] %v750
    %783 = vst [vmem:[#allocation2 + $0x18] sm:$0xff] %v751
    %784 = vst [vmem:[#allocation2 + $0x20] sm:$0xff] %v752
    %785 = vst [vmem:[#allocation2 + $0x28] sm:$0xff] %v753
    %786 = vst [vmem:[#allocation2 + $0x30] sm:$0xff] %v754
    %787 = vst [vmem:[#allocation2 + $0x38] sm:$0xff] %v755
    %788 = vst [vmem:[#allocation2 + $0x40] sm:$0xff] %v756
    %789 = vst [vmem:[#allocation2 + $0x48] sm:$0xff] %v757
    %790 = vst [vmem:[#allocation2 + $0x50] sm:$0xff] %v758
    %791 = vst [vmem:[#allocation2 + $0x58] sm:$0xff] %v759
    %792 = vst [vmem:[#allocation2 + $0x60] sm:$0xff] %v760
    %793 = vst [vmem:[#allocation2 + $0x68] sm:$0xff] %v761
    %794 = vst [vmem:[#allocation2 + $0x70] sm:$0xff] %v762
    %795 = vst [vmem:[#allocation2 + $0x78] sm:$0xff] %v763
    %796 = vst [vmem:[#allocation2 + $0x80] sm:$0xff] %v764
    %797 = vst [vmem:[#allocation2 + $0x88] sm:$0xff] %v765
    %798 = vst [vmem:[#allocation2 + $0x90] sm:$0xff] %v766
    %799 = vst [vmem:[#allocation2 + $0x98] sm:$0xff] %v767
    %800 = vst [vmem:[#allocation2 + $0xa0] sm:$0xff] %v768
    %801 = vst [vmem:[#allocation2 + $0xa8] sm:$0xff] %v769
    %802 = vst [vmem:[#allocation2 + $0xb0] sm:$0xff] %v770
    %803 = vst [vmem:[#allocation2 + $0xb8] sm:$0xff] %v771
    %804 = vst [vmem:[#allocation2 + $0xc0] sm:$0xff] %v772
    %805 = vst [vmem:[#allocation2 + $0xc8] sm:$0xff] %v773
    %806 = vst [vmem:[#allocation2 + $0xd0] sm:$0xff] %v774
    %807 = vst [vmem:[#allocation2 + $0xd8] sm:$0xff] %v775
    %808 = vst [vmem:[#allocation2 + $0xe0] sm:$0xff] %v776
    %809 = vst [vmem:[#allocation2 + $0xe8] sm:$0xff] %v777
    %810 = vst [vmem:[#allocation2 + $0xf0] sm:$0xff] %v778
    %811 = vst [vmem:[#allocation2 + $0xf8] sm:$0xff] %v779
    // Predicated region
    $region22: #{tpu_custom_call.1} parent=1 // pred_check
      _
    $region23: #{tpu_custom_call.1} parent=1 // pred_check_branch
      %813 = sbr.rel (0) target = $region25
    $region24: #{tpu_custom_call.1} parent=1 // pred_region
      %s815 = ssub.s32 4096, 4096
      %816 = vsyncadd [#allocation3], %s815
      %s817 = sshll.u32 [#allocation2], 4
      %s818 = int_to_ptr.vmem [resolvable:$true] %s817
      %823 = dma.vmem_to_hbm [thread:$0]  %s818, 4096, %s5, [#allocation3], 128, 128, 8
    $region25: #{tpu_custom_call.1} parent=1 // pred_fallthru
      _
    // Predicated region
    $region26: #{tpu_custom_call.1} parent=1 // pred_check
      _
    $region27: #{tpu_custom_call.1} parent=1 // pred_check_branch
      %825 = sbr.rel (0) target = $region29
    $region28: #{tpu_custom_call.1} parent=1 // pred_region
      %826 = dma.done [#allocation3], 4096
    $region29: #{tpu_custom_call.1} parent=1 // pred_fallthru
      _
    %827 = vsyncpa [#allocation3], 1

</llo_original>
